<compile_context>
chip_gen: v6e
topology: v6e:2x2x1
jax: 0.10.0
libtpu: 0.0.40
codegen_flags: <defaults>
</compile_context>

<pallas_src>
import jax
import jax.numpy as jnp
from jax.experimental import pallas as pl
from jax.experimental.pallas import tpu as pltpu


def _make_kernel(C, HW, HW_pad, eps, small_c):
    pad = HW_pad != HW
    f32 = jnp.float32

    def kernel(x_ref, wm_ref, bm_ref, w1a_ref, w1b_ref, b1_ref,
               g_ref, be_ref, w2_ref, b2_ref, o_ref):
        x = x_ref[...]                                   # (TB, C, HW_pad), input dtype
        TB = x.shape[0]

        # ---- spatial-attention logits: 1x1 conv C -> 1 ----
        if small_c:
            # VPU route: broadcast wm over lanes, multiply, sublane-reduce over C.
            logits = jnp.sum(x * wm_ref[...], axis=1).astype(f32)        # (TB, HW_pad)
        else:
            # MXU route: batched (1,C) @ (C,HW) per batch element; HW stays on lanes.
            wm_b = jnp.broadcast_to(wm_ref[...][None], (TB, 1, C))       # (TB, 1, C)
            logits = jax.lax.dot_general(
                wm_b, x, dimension_numbers=(((2,), (1,)), ((0,), (0,))),
                preferred_element_type=f32)[:, 0, :]                     # (TB, HW_pad)
        logits = logits + bm_ref[...]                                    # (1,1) broadcast

        if pad:
            lane = jax.lax.broadcasted_iota(jnp.int32, (TB, HW_pad), 1)
            logits = jnp.where(lane < HW, logits, -jnp.inf)

        # ---- softmax over spatial positions (f32) ----
        m = jnp.max(logits, axis=-1, keepdims=True)
        e = jnp.exp(logits - m)
        attn = e / jnp.sum(e, axis=-1, keepdims=True)                    # (TB, HW_pad)

        # ---- both pools as ONE batched MXU matmul against [attn ; 1/HW] ----
        if pad:
            avg_w = jnp.where(lane < HW, 1.0 / HW, 0.0).astype(f32)      # mask pad lanes
        else:
            avg_w = jnp.full((TB, HW_pad), 1.0 / HW, dtype=f32)
        # pool weights cast to x.dtype so bf16 inputs stay bf16 on the MXU (f32 acc).
        pool = jnp.concatenate([attn[:, None, :], avg_w[:, None, :]],
                               axis=1).astype(x.dtype)                   # (TB, 2, HW_pad)
        ctx = jax.lax.dot_general(                                       # (TB, C, 2) f32
            x, pool, dimension_numbers=(((2,), (2,)), ((0,), (0,))),
            preferred_element_type=f32)
        ctx1 = ctx[:, :, 0]                                              # attention pool
        ctx2 = ctx[:, :, 1]                                              # average pool

        # ---- tiny channel MLP: 1x1 conv -> LayerNorm(P) -> ReLU -> 1x1 conv ----
        h = (jnp.dot(ctx1, w1a_ref[...], preferred_element_type=f32)
             + jnp.dot(ctx2, w1b_ref[...], preferred_element_type=f32)
             + b1_ref[...])                                              # (TB, P)
        mu = jnp.mean(h, axis=-1, keepdims=True)
        d = h - mu
        var = jnp.mean(d * d, axis=-1, keepdims=True)
        hn = d * jax.lax.rsqrt(var + eps) * g_ref[...] + be_ref[...]
        hr = jnp.maximum(hn, 0.0)
        gate = jax.nn.sigmoid(
            jnp.dot(hr, w2_ref[...], preferred_element_type=f32)
            + b2_ref[...])                                               # (TB, C)

        # ---- per-channel scaling stays in the input dtype ----
        o_ref[...] = x * gate.astype(x.dtype)[:, :, None]

    return kernel


def selection_forward(x_nchw, wm, bm, w1, b1, gamma, beta, w2, b2, eps=1e-5):
    """Forward pass of the `selection` module.

    x_nchw : (B, C, H, W)
    wm     : (C,)      conv_mask.weight          (torch shape (1, C, 1, 1))
    bm     : ()        conv_mask.bias
    w1     : (P, 2C)   channel_mul_conv[0].weight ((P, 2C, 1, 1))
    b1     : (P,)      channel_mul_conv[0].bias
    gamma  : (P,)      LayerNorm weight           ((P, 1, 1))
    beta   : (P,)      LayerNorm bias
    w2     : (C, P)    channel_mul_conv[3].weight ((C, P, 1, 1))
    b2     : (C,)      channel_mul_conv[3].bias
    """
    B, C, H, W = x_nchw.shape
    HW = H * W
    P = w1.shape[0]
    f32 = jnp.float32
    dtype = x_nchw.dtype
    itemsize = jnp.dtype(dtype).itemsize
    small_c = C <= 32

    # ---- lane-dense spatial axis: pad HW to a multiple of 128 ----
    HW_pad = max(128, ((HW + 127) // 128) * 128)
    x_flat = x_nchw.reshape(B, C, HW)
    if HW_pad != HW:
        x_flat = jnp.pad(x_flat, ((0, 0), (0, 0), (0, HW_pad - HW)))

    # ---- batch elements per grid step (TB) ----
    per_batch_bytes = C * HW_pad * itemsize
    target_bytes = 2 * 1024 * 1024      # ~2 MB / step amortizes pipeline overhead
    buf_cap_bytes = 8 * 1024 * 1024     # keep x+out double-buffering inside v7x's 64 MiB
    tb_cap = max(1, min(target_bytes, buf_cap_bytes) // per_batch_bytes)
    tb_cap = min(tb_cap, B)
    if B >= 2:                          # >= 2 grid steps so both v7x TensorCores get work
        tb_cap = min(tb_cap, max(1, B // 2))
    TB = max(d for d in range(1, tb_cap + 1) if B % d == 0)
    grid = (B // TB,)

    # ---- weights: grid-invariant (resident) VMEM blocks ----
    if small_c:
        wm_k = wm.reshape(C, 1).astype(dtype)      # pre-cast to x.dtype (review)
    else:
        wm_k = wm.reshape(1, C).astype(dtype)
    bm_k = jnp.asarray(bm, dtype=f32).reshape(1, 1)
    w1a_t = w1[:, :C].T.astype(f32)                # (C, P) acts on attention pool
    w1b_t = w1[:, C:].T.astype(f32)                # (C, P) acts on average pool
    b1_k = b1.reshape(1, P).astype(f32)
    g_k = gamma.reshape(1, P).astype(f32)
    be_k = beta.reshape(1, P).astype(f32)
    w2_t = w2.T.astype(f32)                        # (P, C)
    b2_k = b2.reshape(1, C).astype(f32)

    def _full(a):                                  # full-array, grid-invariant block
        assert a.ndim == 2
        return pl.BlockSpec(a.shape, lambda b: (0, 0))

    kernel = _make_kernel(C, HW, HW_pad, eps, small_c)

    cost = pl.CostEstimate(
        flops=int(8 * B * C * HW_pad + 6 * B * C * P),
        transcendentals=int(B * (HW_pad + C + P)),
        bytes_accessed=int(2 * B * C * HW_pad * itemsize),
    )

    out_flat = pl.pallas_call(
        kernel,
        out_shape=jax.ShapeDtypeStruct((B, C, HW_pad), dtype),
        grid=grid,
        in_specs=[
            pl.BlockSpec((TB, C, HW_pad), lambda b: (b, 0, 0)),   # x: TB batches / step
            _full(wm_k), _full(bm_k),
            _full(w1a_t), _full(w1b_t), _full(b1_k),
            _full(g_k), _full(be_k),
            _full(w2_t), _full(b2_k),
        ],
        out_specs=pl.BlockSpec((TB, C, HW_pad), lambda b: (b, 0, 0)),
        compiler_params=pltpu.CompilerParams(
            dimension_semantics=("parallel",),
            vmem_limit_bytes=48 * 1024 * 1024,
        ),
        cost_estimate=cost,
    )(x_flat, wm_k, bm_k, w1a_t, w1b_t, b1_k, g_k, be_k, w2_t, b2_k)

    if HW_pad != HW:
        out_flat = out_flat[:, :, :HW]
    return out_flat.reshape(B, C, H, W)


def _reference(x, wm, bm, w1, b1, gamma, beta, w2, b2, eps=1e-5):
    # Pure-JAX reference mirroring the PyTorch `selection` module exactly.
    B, C, H, W = x.shape
    xf = x.reshape(B, C, H * W)
    logits = jnp.einsum('c,bcs->bs', wm, xf) + bm            # conv_mask (1x1)
    attn = jax.nn.softmax(logits, axis=-1)                   # softmax over spatial
    ctx1 = jnp.einsum('bcs,bs->bc', xf, attn)                # spatial pool
    ctx2 = jnp.mean(xf, axis=-1)                             # adaptive avg pool
    ctx = jnp.concatenate([ctx1, ctx2], axis=-1)             # (B, 2C)
    h = ctx @ w1.T + b1                                      # 1x1 conv 2C -> P
    mu = jnp.mean(h, axis=-1, keepdims=True)
    var = jnp.mean((h - mu) ** 2, axis=-1, keepdims=True)
    h = (h - mu) / jnp.sqrt(var + eps) * gamma + beta        # LayerNorm([P,1,1])
    h = jnp.maximum(h, 0.0)                                  # ReLU
    gate = jax.nn.sigmoid(h @ w2.T + b2)                     # 1x1 conv P -> C, sigmoid
    return x * gate[:, :, None, None]


if __name__ == "__main__":
    def _run_case(key, B, C, H, W, P, label):
        ks = jax.random.split(key, 9)
        x = jax.random.normal(ks[0], (B, C, H, W), dtype=jnp.float32)

        def _uniform(k, shape, fan_in):
            lim = 1.0 / (fan_in ** 0.5)
            return jax.random.uniform(k, shape, jnp.float32, minval=-lim, maxval=lim)

        wm = _uniform(ks[1], (C,), C)            # conv_mask weight
        bm = _uniform(ks[2], (), C)              # conv_mask bias
        w1 = _uniform(ks[3], (P, 2 * C), 2 * C)  # channel_mul_conv[0]
        b1 = _uniform(ks[4], (P,), 2 * C)
        gamma = 1.0 + 0.1 * jax.random.normal(ks[5], (P,), jnp.float32)
        beta = 0.1 * jax.random.normal(ks[6], (P,), jnp.float32)
        w2 = _uniform(ks[7], (C, P), P)          # channel_mul_conv[3]
        b2 = _uniform(ks[8], (C,), P)

        out = selection_forward(x, wm, bm, w1, b1, gamma, beta, w2, b2)
        out = jax.block_until_ready(out)
        ref = _reference(x, wm, bm, w1, b1, gamma, beta, w2, b2)
        assert out.shape == x.shape
        err = jnp.max(jnp.abs(out - ref))
        assert jnp.allclose(out, ref, atol=1e-5, rtol=1e-5), \
            f"{label}: mismatch vs reference: {err}"

    key = jax.random.PRNGKey(0)
    k1, k2 = jax.random.split(key)
    # Small case (inplanes=4, planes=8, 16x16): HW=256 lane-aligned, TB=2, grid=(2,).
    _run_case(k1, B=4, C=4, H=16, W=16, P=8, label="small")
    # Larger-C + non-128 spatial case: exercises the MXU-logits and HW-padding paths.
    _run_case(k2, B=2, C=40, H=7, W=7, P=16, label="padded")

    print("KERNEL_OK")
</pallas_src>

<mosaic_0001>
module attributes {stable_mosaic.version = 11 : i64} {
  func.func @kernel(%arg0: i32, %arg1: memref<2x4x256xf32, #tpu.memory_space<vmem>>, %arg2: memref<4x1xf32, #tpu.memory_space<vmem>>, %arg3: memref<1x1xf32, #tpu.memory_space<vmem>>, %arg4: memref<4x8xf32, #tpu.memory_space<vmem>>, %arg5: memref<4x8xf32, #tpu.memory_space<vmem>>, %arg6: memref<1x8xf32, #tpu.memory_space<vmem>>, %arg7: memref<1x8xf32, #tpu.memory_space<vmem>>, %arg8: memref<1x8xf32, #tpu.memory_space<vmem>>, %arg9: memref<8x4xf32, #tpu.memory_space<vmem>>, %arg10: memref<1x4xf32, #tpu.memory_space<vmem>>, %arg11: memref<2x4x256xf32, #tpu.memory_space<vmem>>) attributes {dimension_semantics = [#tpu.dimension_semantics<parallel>], iteration_bounds = array<i64: 2>, scalar_prefetch = 0 : i64, scratch_operands = 0 : i64, tpu.core_type = #tpu.core_type<tc>, window_params = [{transform_indices = @transform_0, window_bounds = array<i64: 2, 4, 256>}, {pipeline_mode = #tpu.pipeline_mode<synchronous>, transform_indices = @transform_1, window_bounds = array<i64: 4, 1>}, {pipeline_mode = #tpu.pipeline_mode<synchronous>, transform_indices = @transform_2, window_bounds = array<i64: 1, 1>}, {pipeline_mode = #tpu.pipeline_mode<synchronous>, transform_indices = @transform_3, window_bounds = array<i64: 4, 8>}, {pipeline_mode = #tpu.pipeline_mode<synchronous>, transform_indices = @transform_4, window_bounds = array<i64: 4, 8>}, {pipeline_mode = #tpu.pipeline_mode<synchronous>, transform_indices = @transform_5, window_bounds = array<i64: 1, 8>}, {pipeline_mode = #tpu.pipeline_mode<synchronous>, transform_indices = @transform_6, window_bounds = array<i64: 1, 8>}, {pipeline_mode = #tpu.pipeline_mode<synchronous>, transform_indices = @transform_7, window_bounds = array<i64: 1, 8>}, {pipeline_mode = #tpu.pipeline_mode<synchronous>, transform_indices = @transform_8, window_bounds = array<i64: 8, 4>}, {pipeline_mode = #tpu.pipeline_mode<synchronous>, transform_indices = @transform_9, window_bounds = array<i64: 1, 4>}, {transform_indices = @transform_10, window_bounds = array<i64: 2, 4, 256>}]} {
    %c0 = arith.constant 0 : index
    %c0_0 = arith.constant 0 : index
    %c0_1 = arith.constant 0 : index
    %0 = vector.load %arg1[%c0, %c0_0, %c0_1] : memref<2x4x256xf32, #tpu.memory_space<vmem>>, vector<2x4x256xf32>
    %c0_2 = arith.constant 0 : index
    %c0_3 = arith.constant 0 : index
    %1 = vector.load %arg2[%c0_2, %c0_3] : memref<4x1xf32, #tpu.memory_space<vmem>>, vector<4x1xf32>
    %2 = vector.shape_cast %1 : vector<4x1xf32> to vector<1x4x1xf32>
    %3 = vector.broadcast %2 : vector<1x4x1xf32> to vector<2x4x256xf32>
    %4 = arith.mulf %0, %3 : vector<2x4x256xf32>
    %cst = arith.constant dense<0.000000e+00> : vector<2x256xf32>
    %5 = vector.multi_reduction <add>, %4, %cst [1] : vector<2x4x256xf32> to vector<2x256xf32>
    %c0_4 = arith.constant 0 : index
    %c0_5 = arith.constant 0 : index
    %6 = vector.load %arg3[%c0_4, %c0_5] : memref<1x1xf32, #tpu.memory_space<vmem>>, vector<1x1xf32>
    %7 = vector.broadcast %6 : vector<1x1xf32> to vector<2x256xf32>
    %8 = arith.addf %5, %7 : vector<2x256xf32>
    %cst_6 = arith.constant dense<0xFF800000> : vector<2xf32>
    %9 = vector.multi_reduction <maximumf>, %8, %cst_6 [1] : vector<2x256xf32> to vector<2xf32>
    %10 = vector.shape_cast %9 : vector<2xf32> to vector<2x1xf32>
    %11 = vector.broadcast %10 : vector<2x1xf32> to vector<2x256xf32>
    %12 = arith.subf %8, %11 : vector<2x256xf32>
    %13 = math.exp %12 : vector<2x256xf32>
    %cst_7 = arith.constant dense<0.000000e+00> : vector<2xf32>
    %14 = vector.multi_reduction <add>, %13, %cst_7 [1] : vector<2x256xf32> to vector<2xf32>
    %15 = vector.shape_cast %14 : vector<2xf32> to vector<2x1xf32>
    %16 = vector.broadcast %15 : vector<2x1xf32> to vector<2x256xf32>
    %17 = arith.divf %13, %16 : vector<2x256xf32>
    %cst_8 = arith.constant 3.906250e-03 : f32
    %18 = vector.broadcast %cst_8 : f32 to vector<2x256xf32>
    %19 = vector.shape_cast %17 : vector<2x256xf32> to vector<2x1x256xf32>
    %20 = vector.shape_cast %18 : vector<2x256xf32> to vector<2x1x256xf32>
    %21 = tpu.concatenate %19, %20 in 1 : vector<2x1x256xf32>, vector<2x1x256xf32> -> vector<2x2x256xf32>
    %cst_9 = arith.constant dense<0.000000e+00> : vector<2x4x2xf32>
    %22 = tpu.matmul %0, %21, %cst_9 {dimension_numbers = #tpu.dot_dimension_numbers<[2], [2], [1], [1], [0, 0, 0, 1, 1, 1], [0], [0]>} : vector<2x4x256xf32>, vector<2x2x256xf32>, vector<2x4x2xf32> -> vector<2x4x2xf32>
    %23 = vector.extract_strided_slice %22 {offsets = [0, 0, 0], sizes = [2, 4, 1], strides = [1, 1, 1]} : vector<2x4x2xf32> to vector<2x4x1xf32>
    %24 = vector.shape_cast %23 : vector<2x4x1xf32> to vector<2x4xf32>
    %25 = vector.extract_strided_slice %22 {offsets = [0, 0, 1], sizes = [2, 4, 1], strides = [1, 1, 1]} : vector<2x4x2xf32> to vector<2x4x1xf32>
    %26 = vector.shape_cast %25 : vector<2x4x1xf32> to vector<2x4xf32>
    %c0_10 = arith.constant 0 : index
    %c0_11 = arith.constant 0 : index
    %27 = vector.load %arg4[%c0_10, %c0_11] : memref<4x8xf32, #tpu.memory_space<vmem>>, vector<4x8xf32>
    %cst_12 = arith.constant dense<0.000000e+00> : vector<2x8xf32>
    %28 = tpu.matmul %24, %27, %cst_12 {dimension_numbers = #tpu.dot_dimension_numbers<[1], [0], [0], [1], [0, 0, 1, 1], [], []>} : vector<2x4xf32>, vector<4x8xf32>, vector<2x8xf32> -> vector<2x8xf32>
    %c0_13 = arith.constant 0 : index
    %c0_14 = arith.constant 0 : index
    %29 = vector.load %arg5[%c0_13, %c0_14] : memref<4x8xf32, #tpu.memory_space<vmem>>, vector<4x8xf32>
    %cst_15 = arith.constant dense<0.000000e+00> : vector<2x8xf32>
    %30 = tpu.matmul %26, %29, %cst_15 {dimension_numbers = #tpu.dot_dimension_numbers<[1], [0], [0], [1], [0, 0, 1, 1], [], []>} : vector<2x4xf32>, vector<4x8xf32>, vector<2x8xf32> -> vector<2x8xf32>
    %31 = arith.addf %28, %30 : vector<2x8xf32>
    %c0_16 = arith.constant 0 : index
    %c0_17 = arith.constant 0 : index
    %32 = vector.load %arg6[%c0_16, %c0_17] : memref<1x8xf32, #tpu.memory_space<vmem>>, vector<1x8xf32>
    %33 = vector.broadcast %32 : vector<1x8xf32> to vector<2x8xf32>
    %34 = arith.addf %31, %33 : vector<2x8xf32>
    %cst_18 = arith.constant dense<0.000000e+00> : vector<2xf32>
    %35 = vector.multi_reduction <add>, %34, %cst_18 [1] : vector<2x8xf32> to vector<2xf32>
    %36 = vector.shape_cast %35 : vector<2xf32> to vector<2x1xf32>
    %cst_19 = arith.constant 8.000000e+00 : f32
    %37 = vector.broadcast %cst_19 : f32 to vector<2x1xf32>
    %38 = arith.divf %36, %37 : vector<2x1xf32>
    %39 = vector.broadcast %38 : vector<2x1xf32> to vector<2x8xf32>
    %40 = arith.subf %34, %39 : vector<2x8xf32>
    %41 = arith.mulf %40, %40 : vector<2x8xf32>
    %cst_20 = arith.constant dense<0.000000e+00> : vector<2xf32>
    %42 = vector.multi_reduction <add>, %41, %cst_20 [1] : vector<2x8xf32> to vector<2xf32>
    %43 = vector.shape_cast %42 : vector<2xf32> to vector<2x1xf32>
    %cst_21 = arith.constant 8.000000e+00 : f32
    %44 = vector.broadcast %cst_21 : f32 to vector<2x1xf32>
    %45 = arith.divf %43, %44 : vector<2x1xf32>
    %cst_22 = arith.constant 9.99999974E-6 : f32
    %46 = vector.broadcast %cst_22 : f32 to vector<2x1xf32>
    %47 = arith.addf %45, %46 : vector<2x1xf32>
    %48 = math.rsqrt %47 : vector<2x1xf32>
    %49 = vector.broadcast %48 : vector<2x1xf32> to vector<2x8xf32>
    %50 = arith.mulf %40, %49 : vector<2x8xf32>
    %c0_23 = arith.constant 0 : index
    %c0_24 = arith.constant 0 : index
    %51 = vector.load %arg7[%c0_23, %c0_24] : memref<1x8xf32, #tpu.memory_space<vmem>>, vector<1x8xf32>
    %52 = vector.broadcast %51 : vector<1x8xf32> to vector<2x8xf32>
    %53 = arith.mulf %50, %52 : vector<2x8xf32>
    %c0_25 = arith.constant 0 : index
    %c0_26 = arith.constant 0 : index
    %54 = vector.load %arg8[%c0_25, %c0_26] : memref<1x8xf32, #tpu.memory_space<vmem>>, vector<1x8xf32>
    %55 = vector.broadcast %54 : vector<1x8xf32> to vector<2x8xf32>
    %56 = arith.addf %53, %55 : vector<2x8xf32>
    %cst_27 = arith.constant 0.000000e+00 : f32
    %57 = vector.broadcast %cst_27 : f32 to vector<2x8xf32>
    %58 = arith.maximumf %56, %57 : vector<2x8xf32>
    %c0_28 = arith.constant 0 : index
    %c0_29 = arith.constant 0 : index
    %59 = vector.load %arg9[%c0_28, %c0_29] : memref<8x4xf32, #tpu.memory_space<vmem>>, vector<8x4xf32>
    %cst_30 = arith.constant dense<0.000000e+00> : vector<2x4xf32>
    %60 = tpu.matmul %58, %59, %cst_30 {dimension_numbers = #tpu.dot_dimension_numbers<[1], [0], [0], [1], [0, 0, 1, 1], [], []>} : vector<2x8xf32>, vector<8x4xf32>, vector<2x4xf32> -> vector<2x4xf32>
    %c0_31 = arith.constant 0 : index
    %c0_32 = arith.constant 0 : index
    %61 = vector.load %arg10[%c0_31, %c0_32] : memref<1x4xf32, #tpu.memory_space<vmem>>, vector<1x4xf32>
    %62 = vector.broadcast %61 : vector<1x4xf32> to vector<2x4xf32>
    %63 = arith.addf %60, %62 : vector<2x4xf32>
    %64 = arith.negf %63 : vector<2x4xf32>
    %65 = math.exp %64 : vector<2x4xf32>
    %cst_33 = arith.constant 1.000000e+00 : f32
    %66 = vector.broadcast %cst_33 : f32 to vector<2x4xf32>
    %67 = arith.addf %66, %65 : vector<2x4xf32>
    %68 = arith.divf %66, %67 : vector<2x4xf32>
    %69 = vector.shape_cast %68 : vector<2x4xf32> to vector<2x4x1xf32>
    %70 = vector.broadcast %69 : vector<2x4x1xf32> to vector<2x4x256xf32>
    %71 = arith.mulf %0, %70 : vector<2x4x256xf32>
    %c0_34 = arith.constant 0 : index
    %c0_35 = arith.constant 0 : index
    %c0_36 = arith.constant 0 : index
    %72 = vector.load %arg11[%c0_34, %c0_35, %c0_36] : memref<2x4x256xf32, #tpu.memory_space<vmem>>, vector<2x4x256xf32>
    tpu.vector_store %arg11[%c0_34, %c0_35, %c0_36], %71 {strides = array<i32>} : memref<2x4x256xf32, #tpu.memory_space<vmem>>, vector<2x4x256xf32>,
    return
  }
  func.func @transform_0(%arg0: i32) -> (i32, i32, i32) {
    %c0_i32 = arith.constant 0 : i32
    %c0_i32_0 = arith.constant 0 : i32
    %c0_i32_1 = arith.constant 0 : i32
    return %arg0, %c0_i32, %c0_i32_0 : i32, i32, i32
  }
  func.func @transform_1(%arg0: i32) -> (i32, i32) {
    %c0_i32 = arith.constant 0 : i32
    %c0_i32_0 = arith.constant 0 : i32
    %c0_i32_1 = arith.constant 0 : i32
    return %c0_i32, %c0_i32_0 : i32, i32
  }
  func.func @transform_2(%arg0: i32) -> (i32, i32) {
    %c0_i32 = arith.constant 0 : i32
    %c0_i32_0 = arith.constant 0 : i32
    %c0_i32_1 = arith.constant 0 : i32
    return %c0_i32, %c0_i32_0 : i32, i32
  }
  func.func @transform_3(%arg0: i32) -> (i32, i32) {
    %c0_i32 = arith.constant 0 : i32
    %c0_i32_0 = arith.constant 0 : i32
    %c0_i32_1 = arith.constant 0 : i32
    return %c0_i32, %c0_i32_0 : i32, i32
  }
  func.func @transform_4(%arg0: i32) -> (i32, i32) {
    %c0_i32 = arith.constant 0 : i32
    %c0_i32_0 = arith.constant 0 : i32
    %c0_i32_1 = arith.constant 0 : i32
    return %c0_i32, %c0_i32_0 : i32, i32
  }
  func.func @transform_5(%arg0: i32) -> (i32, i32) {
    %c0_i32 = arith.constant 0 : i32
    %c0_i32_0 = arith.constant 0 : i32
    %c0_i32_1 = arith.constant 0 : i32
    return %c0_i32, %c0_i32_0 : i32, i32
  }
  func.func @transform_6(%arg0: i32) -> (i32, i32) {
    %c0_i32 = arith.constant 0 : i32
    %c0_i32_0 = arith.constant 0 : i32
    %c0_i32_1 = arith.constant 0 : i32
    return %c0_i32, %c0_i32_0 : i32, i32
  }
  func.func @transform_7(%arg0: i32) -> (i32, i32) {
    %c0_i32 = arith.constant 0 : i32
    %c0_i32_0 = arith.constant 0 : i32
    %c0_i32_1 = arith.constant 0 : i32
    return %c0_i32, %c0_i32_0 : i32, i32
  }
  func.func @transform_8(%arg0: i32) -> (i32, i32) {
    %c0_i32 = arith.constant 0 : i32
    %c0_i32_0 = arith.constant 0 : i32
    %c0_i32_1 = arith.constant 0 : i32
    return %c0_i32, %c0_i32_0 : i32, i32
  }
  func.func @transform_9(%arg0: i32) -> (i32, i32) {
    %c0_i32 = arith.constant 0 : i32
    %c0_i32_0 = arith.constant 0 : i32
    %c0_i32_1 = arith.constant 0 : i32
    return %c0_i32, %c0_i32_0 : i32, i32
  }
  func.func @transform_10(%arg0: i32) -> (i32, i32, i32) {
    %c0_i32 = arith.constant 0 : i32
    %c0_i32_0 = arith.constant 0 : i32
    %c0_i32_1 = arith.constant 0 : i32
    return %arg0, %c0_i32, %c0_i32_0 : i32, i32, i32
  }
}

</mosaic_0001>

<llo_original>
// kernel: tpu_custom_call.1
$region0: #{tpu_custom_call.1}
  #allocation0 [shape = 'u32[]', space=smem, size = 0x4, offset = 0x4, fixed_abs, tag = 'smem constant byte address 0x4 - core index']
  #allocation1 [shape = 'u32[144,128]{1,0:T(1,128)}', space=vmem, size = 0x12000, scoped, tag = 'internal scratch']
  #allocation2 [shape = 'f32[1,1]{1,0:T(1,128)S(1)}', space=vmem, size = 0x200, scoped, tag = 'scoped memory for tpu_custom_call.1']
  %s0 = inlined_call_operand.hbm [shape: f32[4,4,256], index: 0, kind: input, shape index: {}]
  %s1 = inlined_call_operand.vmem [shape: f32[4,1], index: 1, kind: input, shape index: {}]
  %s2 = inlined_call_operand.<no memory space> [shape: f32[1,1], index: 2, kind: input, shape index: {}]
  %s3 = inlined_call_operand.vmem [shape: f32[4,8], index: 3, kind: input, shape index: {}]
  %s4 = inlined_call_operand.vmem [shape: f32[4,8], index: 4, kind: input, shape index: {}]
  %s5 = inlined_call_operand.vmem [shape: f32[1,8], index: 5, kind: input, shape index: {}]
  %s6 = inlined_call_operand.vmem [shape: f32[1,8], index: 6, kind: input, shape index: {}]
  %s7 = inlined_call_operand.vmem [shape: f32[1,8], index: 7, kind: input, shape index: {}]
  %s8 = inlined_call_operand.vmem [shape: f32[8,4], index: 8, kind: input, shape index: {}]
  %s9 = inlined_call_operand.vmem [shape: f32[1,4], index: 9, kind: input, shape index: {}]
  %s10 = inlined_call_operand.hbm [shape: f32[4,4,256], index: 10, kind: output, shape index: {}]
  %s11 = sld [smem:[#allocation0]]
  $region77: #{tpu_custom_call.1} parent=0
    _
  %s13 = ssub.s32 1, %s11
  %s14 = scalar_select 0, %s13, %s11
  %v15 = vstv %s2
  %16 = vst [vmem:[#allocation2] sm:$0x1] %v15
  $region1: #{tpu_custom_call.1} parent=0
    #allocation3 [shape = 'u8[16384]{0}', space=vmem, size = 0x4000, scoped, tag = 'input window, operand 0']
    #allocation4 [shape = 's32[2]{0}', space=sflag, size = 0x8, scoped, tag = 'scoped memory for tpu_custom_call.1']
    #allocation5 [shape = 's32[2]{0}', space=sflag, size = 0x8, scoped, tag = 'scoped memory for tpu_custom_call.1']
    #allocation6 [shape = 'u8[16384]{0}', space=vmem, size = 0x4000, scoped, tag = 'output window, operand 0']
    %17 = vsyncpa [#allocation4], 0
    %s18 = scalar_lea.sflag [#allocation4], 1
    %19 = vsyncpa %s18, 0
    %20 = vsyncpa [#allocation5], 0
    %s21 = scalar_lea.sflag [#allocation5], 1
    %22 = vsyncpa %s21, 0
    loop: start=0, step=1, limit=4
    $region2: #{tpu_custom_call.1} parent=1 // loop_pre_header
      _
    $region3: #{tpu_custom_call.1} parent=1 // loop_header
      %s24 = sphi 0, %s28
      %p25 = scmp.ge.s32.totalorder %s24, 4
      %s34 = sphi 0, %s36
      %s37 = sphi 0, %s34
      %s38 = sphi 0, %s37
      %s54 = sphi 0, %s38
      %s58 = sphi 0, %s58
      %s60 = sphi 0, %s58
      %s61 = sphi 0, %s60
      %s75 = sphi 0, %s61
      %s79 = sphi 0, %s79
      %s81 = sphi 0, %s79
      %s82 = sphi 0, %s81
      %s96 = sphi 0, %s82
      %s100 = sphi 0, %s100
      %s102 = sphi 0, %s100
      %s103 = sphi 0, %s102
      %s117 = sphi 0, %s103
      %s121 = sphi 0, %s121
      %s123 = sphi 0, %s121
      %s124 = sphi 0, %s123
      %s138 = sphi 0, %s124
      %s142 = sphi 0, %s142
      %s144 = sphi 0, %s142
      %s145 = sphi 0, %s144
      %s159 = sphi 0, %s145
      %s163 = sphi 0, %s163
      %s165 = sphi 0, %s163
      %s166 = sphi 0, %s165
      %s180 = sphi 0, %s166
      %s184 = sphi 0, %s184
      %s186 = sphi 0, %s184
      %s187 = sphi 0, %s186
      %s201 = sphi 0, %s187
      %s205 = sphi 0, %s205
      %s207 = sphi 0, %s205
      %s208 = sphi 0, %s207
      %s222 = sphi 0, %s208
      %s226 = sphi 0, %s226
      %s228 = sphi 0, %s226
      %s229 = sphi 0, %s228
      %s243 = sphi 0, %s229
      %s249 = sphi 0, %s251
      %s252 = sphi 0, %s249
      %s253 = sphi 0, %s252
      %s269 = sphi 0, %s253
    $region4: #{tpu_custom_call.1} parent=1 // loop_header_branch
      %27 = sbr.rel (%p25) target = $region8
    $region5: #{tpu_custom_call.1} parent=1 // loop_body
      %s29 = ssub.s32 %s24, 1
      %s30 = ssub.s32 %s24, 2
      %s31 = sadd.s32 %s24, 1
      %s32 = ssub.s32 %s24, %s31
      %p33 = scmp.eq.s32.totalorder %s32, 0
      %s35 = sadd.s32 %s34, 1
      %s36 = scalar_select %p33, %s34, %s35
      %p39 = pneg %p33
      %p40 = scmp.eq.s32.totalorder %s24, 1
      %p41 = por %p39, %p40
      %p42 = scmp.ne.s32.totalorder %s34, %s37
      %p43 = scmp.eq.s32.totalorder %s24, 0
      %p44 = por %p42, %p43
      %p45 = scmp.ne.s32.totalorder %s34, %s37
      %p46 = scmp.eq.s32.totalorder %s29, 1
      %p47 = por %p45, %p46
      %p48 = scmp.ne.s32.totalorder %s37, %s38
      %p49 = scmp.eq.s32.totalorder %s29, 0
      %p50 = por %p48, %p49
      %p51 = scmp.ne.s32.totalorder %s37, %s38
      %p52 = scmp.eq.s32.totalorder %s30, 1
      %p53 = por %p51, %p52
      %p55 = scmp.ne.s32.totalorder %s38, %s54
      %p56 = scmp.eq.s32.totalorder %s30, 0
      %p57 = por %p55, %p56
      %s59 = sadd.s32 %s58, 1
      %p62 = scmp.eq.s32.totalorder %s24, 1
      %p63 = scmp.ne.s32.totalorder %s58, %s60
      %p64 = scmp.eq.s32.totalorder %s24, 0
      %p65 = por %p63, %p64
      %p66 = scmp.ne.s32.totalorder %s58, %s60
      %p67 = scmp.eq.s32.totalorder %s29, 1
      %p68 = por %p66, %p67
      %p69 = scmp.ne.s32.totalorder %s60, %s61
      %p70 = scmp.eq.s32.totalorder %s29, 0
      %p71 = por %p69, %p70
      %p72 = scmp.ne.s32.totalorder %s60, %s61
      %p73 = scmp.eq.s32.totalorder %s30, 1
      %p74 = por %p72, %p73
      %p76 = scmp.ne.s32.totalorder %s61, %s75
      %p77 = scmp.eq.s32.totalorder %s30, 0
      %p78 = por %p76, %p77
      %s80 = sadd.s32 %s79, 1
      %p83 = scmp.eq.s32.totalorder %s24, 1
      %p84 = scmp.ne.s32.totalorder %s79, %s81
      %p85 = scmp.eq.s32.totalorder %s24, 0
      %p86 = por %p84, %p85
      %p87 = scmp.ne.s32.totalorder %s79, %s81
      %p88 = scmp.eq.s32.totalorder %s29, 1
      %p89 = por %p87, %p88
      %p90 = scmp.ne.s32.totalorder %s81, %s82
      %p91 = scmp.eq.s32.totalorder %s29, 0
      %p92 = por %p90, %p91
      %p93 = scmp.ne.s32.totalorder %s81, %s82
      %p94 = scmp.eq.s32.totalorder %s30, 1
      %p95 = por %p93, %p94
      %p97 = scmp.ne.s32.totalorder %s82, %s96
      %p98 = scmp.eq.s32.totalorder %s30, 0
      %p99 = por %p97, %p98
      %s101 = sadd.s32 %s100, 1
      %p104 = scmp.eq.s32.totalorder %s24, 1
      %p105 = scmp.ne.s32.totalorder %s100, %s102
      %p106 = scmp.eq.s32.totalorder %s24, 0
      %p107 = por %p105, %p106
      %p108 = scmp.ne.s32.totalorder %s100, %s102
      %p109 = scmp.eq.s32.totalorder %s29, 1
      %p110 = por %p108, %p109
      %p111 = scmp.ne.s32.totalorder %s102, %s103
      %p112 = scmp.eq.s32.totalorder %s29, 0
      %p113 = por %p111, %p112
      %p114 = scmp.ne.s32.totalorder %s102, %s103
      %p115 = scmp.eq.s32.totalorder %s30, 1
      %p116 = por %p114, %p115
      %p118 = scmp.ne.s32.totalorder %s103, %s117
      %p119 = scmp.eq.s32.totalorder %s30, 0
      %p120 = por %p118, %p119
      %s122 = sadd.s32 %s121, 1
      %p125 = scmp.eq.s32.totalorder %s24, 1
      %p126 = scmp.ne.s32.totalorder %s121, %s123
      %p127 = scmp.eq.s32.totalorder %s24, 0
      %p128 = por %p126, %p127
      %p129 = scmp.ne.s32.totalorder %s121, %s123
      %p130 = scmp.eq.s32.totalorder %s29, 1
      %p131 = por %p129, %p130
      %p132 = scmp.ne.s32.totalorder %s123, %s124
      %p133 = scmp.eq.s32.totalorder %s29, 0
      %p134 = por %p132, %p133
      %p135 = scmp.ne.s32.totalorder %s123, %s124
      %p136 = scmp.eq.s32.totalorder %s30, 1
      %p137 = por %p135, %p136
      %p139 = scmp.ne.s32.totalorder %s124, %s138
      %p140 = scmp.eq.s32.totalorder %s30, 0
      %p141 = por %p139, %p140
      %s143 = sadd.s32 %s142, 1
      %p146 = scmp.eq.s32.totalorder %s24, 1
      %p147 = scmp.ne.s32.totalorder %s142, %s144
      %p148 = scmp.eq.s32.totalorder %s24, 0
      %p149 = por %p147, %p148
      %p150 = scmp.ne.s32.totalorder %s142, %s144
      %p151 = scmp.eq.s32.totalorder %s29, 1
      %p152 = por %p150, %p151
      %p153 = scmp.ne.s32.totalorder %s144, %s145
      %p154 = scmp.eq.s32.totalorder %s29, 0
      %p155 = por %p153, %p154
      %p156 = scmp.ne.s32.totalorder %s144, %s145
      %p157 = scmp.eq.s32.totalorder %s30, 1
      %p158 = por %p156, %p157
      %p160 = scmp.ne.s32.totalorder %s145, %s159
      %p161 = scmp.eq.s32.totalorder %s30, 0
      %p162 = por %p160, %p161
      %s164 = sadd.s32 %s163, 1
      %p167 = scmp.eq.s32.totalorder %s24, 1
      %p168 = scmp.ne.s32.totalorder %s163, %s165
      %p169 = scmp.eq.s32.totalorder %s24, 0
      %p170 = por %p168, %p169
      %p171 = scmp.ne.s32.totalorder %s163, %s165
      %p172 = scmp.eq.s32.totalorder %s29, 1
      %p173 = por %p171, %p172
      %p174 = scmp.ne.s32.totalorder %s165, %s166
      %p175 = scmp.eq.s32.totalorder %s29, 0
      %p176 = por %p174, %p175
      %p177 = scmp.ne.s32.totalorder %s165, %s166
      %p178 = scmp.eq.s32.totalorder %s30, 1
      %p179 = por %p177, %p178
      %p181 = scmp.ne.s32.totalorder %s166, %s180
      %p182 = scmp.eq.s32.totalorder %s30, 0
      %p183 = por %p181, %p182
      %s185 = sadd.s32 %s184, 1
      %p188 = scmp.eq.s32.totalorder %s24, 1
      %p189 = scmp.ne.s32.totalorder %s184, %s186
      %p190 = scmp.eq.s32.totalorder %s24, 0
      %p191 = por %p189, %p190
      %p192 = scmp.ne.s32.totalorder %s184, %s186
      %p193 = scmp.eq.s32.totalorder %s29, 1
      %p194 = por %p192, %p193
      %p195 = scmp.ne.s32.totalorder %s186, %s187
      %p196 = scmp.eq.s32.totalorder %s29, 0
      %p197 = por %p195, %p196
      %p198 = scmp.ne.s32.totalorder %s186, %s187
      %p199 = scmp.eq.s32.totalorder %s30, 1
      %p200 = por %p198, %p199
      %p202 = scmp.ne.s32.totalorder %s187, %s201
      %p203 = scmp.eq.s32.totalorder %s30, 0
      %p204 = por %p202, %p203
      %s206 = sadd.s32 %s205, 1
      %p209 = scmp.eq.s32.totalorder %s24, 1
      %p210 = scmp.ne.s32.totalorder %s205, %s207
      %p211 = scmp.eq.s32.totalorder %s24, 0
      %p212 = por %p210, %p211
      %p213 = scmp.ne.s32.totalorder %s205, %s207
      %p214 = scmp.eq.s32.totalorder %s29, 1
      %p215 = por %p213, %p214
      %p216 = scmp.ne.s32.totalorder %s207, %s208
      %p217 = scmp.eq.s32.totalorder %s29, 0
      %p218 = por %p216, %p217
      %p219 = scmp.ne.s32.totalorder %s207, %s208
      %p220 = scmp.eq.s32.totalorder %s30, 1
      %p221 = por %p219, %p220
      %p223 = scmp.ne.s32.totalorder %s208, %s222
      %p224 = scmp.eq.s32.totalorder %s30, 0
      %p225 = por %p223, %p224
      %s227 = sadd.s32 %s226, 1
      %p230 = scmp.eq.s32.totalorder %s24, 1
      %p231 = scmp.ne.s32.totalorder %s226, %s228
      %p232 = scmp.eq.s32.totalorder %s24, 0
      %p233 = por %p231, %p232
      %p234 = scmp.ne.s32.totalorder %s226, %s228
      %p235 = scmp.eq.s32.totalorder %s29, 1
      %p236 = por %p234, %p235
      %p237 = scmp.ne.s32.totalorder %s228, %s229
      %p238 = scmp.eq.s32.totalorder %s29, 0
      %p239 = por %p237, %p238
      %p240 = scmp.ne.s32.totalorder %s228, %s229
      %p241 = scmp.eq.s32.totalorder %s30, 1
      %p242 = por %p240, %p241
      %p244 = scmp.ne.s32.totalorder %s229, %s243
      %p245 = scmp.eq.s32.totalorder %s30, 0
      %p246 = por %p244, %p245
      %s247 = ssub.s32 %s24, %s31
      %p248 = scmp.eq.s32.totalorder %s247, 0
      %s250 = sadd.s32 %s249, 1
      %s251 = scalar_select %p248, %s249, %s250
      %p254 = pneg %p248
      %p255 = scmp.eq.s32.totalorder %s24, 1
      %p256 = por %p254, %p255
      %p257 = scmp.ne.s32.totalorder %s249, %s252
      %p258 = scmp.eq.s32.totalorder %s24, 0
      %p259 = por %p257, %p258
      %p260 = scmp.ne.s32.totalorder %s249, %s252
      %p261 = scmp.eq.s32.totalorder %s29, 1
      %p262 = por %p260, %p261
      %p263 = scmp.ne.s32.totalorder %s252, %s253
      %p264 = scmp.eq.s32.totalorder %s29, 0
      %p265 = por %p263, %p264
      %p266 = scmp.ne.s32.totalorder %s252, %s253
      %p267 = scmp.eq.s32.totalorder %s30, 1
      %p268 = por %p266, %p267
      %p270 = scmp.ne.s32.totalorder %s253, %s269
      %p271 = scmp.eq.s32.totalorder %s30, 0
      %p272 = por %p270, %p271
      %p273 = scmp.le.s32.totalorder 1, %s24
      %p274 = scmp.lt.s32.totalorder %s24, 3
      %p275 = pnand %p273, %p274
      %p276 = pneg %p275
      // Predicated region
      $region9: #{tpu_custom_call.1} parent=5 // pred_check
        _
      $region10: #{tpu_custom_call.1} parent=5 // pred_check_branch
        %278 = sbr.rel (%p275) target = $region12
      $region11: #{tpu_custom_call.1} parent=5 // pred_region
        %s279 = ssub.s32 %s24, 1
        // Predicated region
        $region13: #{tpu_custom_call.1} parent=11 // pred_check
          %p280 = pneg %p71
        $region14: #{tpu_custom_call.1} parent=11 // pred_check_branch
          %282 = sbr.rel (%p280) target = $region16
        $region15: #{tpu_custom_call.1} parent=11 // pred_region
          _
        $region16: #{tpu_custom_call.1} parent=11 // pred_fallthru
          _
        // Predicated region
        $region17: #{tpu_custom_call.1} parent=11 // pred_check
          %p283 = pneg %p92
        $region18: #{tpu_custom_call.1} parent=11 // pred_check_branch
          %285 = sbr.rel (%p283) target = $region20
        $region19: #{tpu_custom_call.1} parent=11 // pred_region
          _
        $region20: #{tpu_custom_call.1} parent=11 // pred_fallthru
          _
        // Predicated region
        $region21: #{tpu_custom_call.1} parent=11 // pred_check
          %p286 = pneg %p113
        $region22: #{tpu_custom_call.1} parent=11 // pred_check_branch
          %288 = sbr.rel (%p286) target = $region24
        $region23: #{tpu_custom_call.1} parent=11 // pred_region
          _
        $region24: #{tpu_custom_call.1} parent=11 // pred_fallthru
          _
        // Predicated region
        $region25: #{tpu_custom_call.1} parent=11 // pred_check
          %p289 = pneg %p134
        $region26: #{tpu_custom_call.1} parent=11 // pred_check_branch
          %291 = sbr.rel (%p289) target = $region28
        $region27: #{tpu_custom_call.1} parent=11 // pred_region
          _
        $region28: #{tpu_custom_call.1} parent=11 // pred_fallthru
          _
        // Predicated region
        $region29: #{tpu_custom_call.1} parent=11 // pred_check
          %p292 = pneg %p155
        $region30: #{tpu_custom_call.1} parent=11 // pred_check_branch
          %294 = sbr.rel (%p292) target = $region32
        $region31: #{tpu_custom_call.1} parent=11 // pred_region
          _
        $region32: #{tpu_custom_call.1} parent=11 // pred_fallthru
          _
        // Predicated region
        $region33: #{tpu_custom_call.1} parent=11 // pred_check
          %p295 = pneg %p176
        $region34: #{tpu_custom_call.1} parent=11 // pred_check_branch
          %297 = sbr.rel (%p295) target = $region36
        $region35: #{tpu_custom_call.1} parent=11 // pred_region
          _
        $region36: #{tpu_custom_call.1} parent=11 // pred_fallthru
          _
        // Predicated region
        $region37: #{tpu_custom_call.1} parent=11 // pred_check
          %p298 = pneg %p197
        $region38: #{tpu_custom_call.1} parent=11 // pred_check_branch
          %300 = sbr.rel (%p298) target = $region40
        $region39: #{tpu_custom_call.1} parent=11 // pred_region
          _
        $region40: #{tpu_custom_call.1} parent=11 // pred_fallthru
          _
        // Predicated region
        $region41: #{tpu_custom_call.1} parent=11 // pred_check
          %p301 = pneg %p218
        $region42: #{tpu_custom_call.1} parent=11 // pred_check_branch
          %303 = sbr.rel (%p301) target = $region44
        $region43: #{tpu_custom_call.1} parent=11 // pred_region
          _
        $region44: #{tpu_custom_call.1} parent=11 // pred_fallthru
          _
        // Predicated region
        $region45: #{tpu_custom_call.1} parent=11 // pred_check
          %p304 = pneg %p239
        $region46: #{tpu_custom_call.1} parent=11 // pred_check_branch
          %306 = sbr.rel (%p304) target = $region48
        $region47: #{tpu_custom_call.1} parent=11 // pred_region
          _
        $region48: #{tpu_custom_call.1} parent=11 // pred_fallthru
          _
      $region12: #{tpu_custom_call.1} parent=5 // pred_fallthru
        _
      %p307 = scmp.lt.s32.totalorder %s24, 2
      // Predicated region
      $region49: #{tpu_custom_call.1} parent=5 // pred_check
        %p308 = pneg %p307
      $region50: #{tpu_custom_call.1} parent=5 // pred_check_branch
        %310 = sbr.rel (%p308) target = $region52
      $region51: #{tpu_custom_call.1} parent=5 // pred_region
        // Predicated region
        $region53: #{tpu_custom_call.1} parent=51 // pred_check
          %p311 = pneg %p44
        $region54: #{tpu_custom_call.1} parent=51 // pred_check_branch
          %313 = sbr.rel (%p311) target = $region56
        $region55: #{tpu_custom_call.1} parent=51 // pred_region
          %s314 = sand.u32 %s34, 1
          %s315 = scalar_lea.sflag [#allocation4], %s314
          %s316 = sand.u32 %s34, 1
          %s317 = smul.addr %s316, 16
          %s318 = scalar_lea.vmem [#allocation3], %s317
          %s319 = smul.u32 2, %s24
          %s321 = ssub.s32 256, 256
          %322 = vsyncadd %s315, %s321
          %s323 = smul.addr %s319, 2
          %s324 = smul.addr %s323, 64
          %s325 = scalar_lea.hbm %s0, %s324
          %s326 = sshll.u32 %s318, 4
          %s327 = int_to_ptr.vmem [resolvable:$true] %s326
          %332 = dma.hbm_to_vmem [thread:$0]  %s325, 256, %s327, %s315, 128, 128, 8
        $region56: #{tpu_custom_call.1} parent=51 // pred_fallthru
          _
      $region52: #{tpu_custom_call.1} parent=5 // pred_fallthru
        _
      %p333 = scmp.le.s32.totalorder 1, %s24
      %p334 = scmp.lt.s32.totalorder %s24, 3
      %p335 = pnand %p333, %p334
      %p336 = pneg %p335
      // Predicated region
      $region57: #{tpu_custom_call.1} parent=5 // pred_check
        _
      $region58: #{tpu_custom_call.1} parent=5 // pred_check_branch
        %338 = sbr.rel (%p335) target = $region60
      $region59: #{tpu_custom_call.1} parent=5 // pred_region
        %s339 = ssub.s32 %s24, 1
        %s340 = sand.u32 %s37, 1
        %s341 = scalar_lea.sflag [#allocation4], %s340
        %s342 = sand.u32 %s37, 1
        %s343 = smul.addr %s342, 16
        %s344 = scalar_lea.vmem [#allocation3], %s343
        // Predicated region
        $region61: #{tpu_custom_call.1} parent=59 // pred_check
          %p345 = pneg %p50
        $region62: #{tpu_custom_call.1} parent=59 // pred_check_branch
          %347 = sbr.rel (%p345) target = $region64
        $region63: #{tpu_custom_call.1} parent=59 // pred_region
          %348 = dma.done %s341, 256
        $region64: #{tpu_custom_call.1} parent=59 // pred_fallthru
          _
        %s349 = sand.u32 %s37, 1
        %s350 = scalar_lea.sflag [#allocation4], %s349
        %s351 = sand.u32 %s37, 1
        %s352 = smul.addr %s351, 16
        %s353 = scalar_lea.vmem [#allocation3], %s352
        %p354 = pneg %p50
        %p355 = pneg %p47
        %p356 = pneg %p71
        %p357 = pneg %p68
        %p358 = pneg %p92
        %p359 = pneg %p89
        %p360 = pneg %p113
        %p361 = pneg %p110
        %p362 = pneg %p134
        %p363 = pneg %p131
        %p364 = pneg %p155
        %p365 = pneg %p152
        %p366 = pneg %p176
        %p367 = pneg %p173
        %p368 = pneg %p197
        %p369 = pneg %p194
        %p370 = pneg %p218
        %p371 = pneg %p215
        %p372 = pneg %p239
        %p373 = pneg %p236
        %p374 = pneg %p265
        %p375 = pneg %p262
        %s376 = sand.u32 %s252, 1
        %s377 = scalar_lea.sflag [#allocation5], %s376
        %s378 = sand.u32 %s252, 1
        %s379 = smul.addr %s378, 16
        %s380 = scalar_lea.vmem [#allocation6], %s379
        %s381 = smul.u32 2, %s29
        %s382 = smul.u32 2, %s29
        %v383 = vld [vmem:[%s344] sm:$0xff]
        %v384 = vld [vmem:[%s344 + $0x8] sm:$0xff]
        %v385 = vld [vmem:[%s1] sm:$0xf]
        %387 = vset.pattern.permute.xlu0 0
        %388 = vperm.xlu0 %387, %v385
        %v389 = vpop.permute.xlu0 %388
        %v391 = vunpack.c.l.s4 839922192
        %v392 = vunpack.c.0.s8 %v391
        %v393 = vlaneseq
        %v394 = vshrl.u32 %v393, 7
        %v395 = vsub.s32 %v392, %v394
        %v396 = vrot.slane %v389, %v395
        %v398 = vmul.f32 %v383, %v396
        %v399 = vmul.f32 %v384, %v396
        %v402 = vcombine.high %v398, %v398
        %v403 = vcombine.high %v399, %v399
        %vm406 = vcmask 1043456
        %v407 = vsel %vm406, %v398, 0.0
        %v408 = vrot.slane %v407, 4
        %v409 = vadd.f32 %v407, %v408
        %v410 = vrot.slane %v409, 2
        %v411 = vadd.f32 %v409, %v410
        %v412 = vrot.slane %v411, 1
        %v413 = vadd.f32 %v411, %v412
        %v414 = vsel %vm406, %v402, 0.0
        %v415 = vrot.slane %v414, 4
        %v416 = vadd.f32 %v414, %v415
        %v417 = vrot.slane %v416, 2
        %v418 = vadd.f32 %v416, %v417
        %v419 = vrot.slane %v418, 1
        %v420 = vadd.f32 %v418, %v419
        %v421 = vsel %vm406, %v399, 0.0
        %v422 = vrot.slane %v421, 4
        %v423 = vadd.f32 %v421, %v422
        %v424 = vrot.slane %v423, 2
        %v425 = vadd.f32 %v423, %v424
        %v426 = vrot.slane %v425, 1
        %v427 = vadd.f32 %v425, %v426
        %v428 = vsel %vm406, %v403, 0.0
        %v429 = vrot.slane %v428, 4
        %v430 = vadd.f32 %v428, %v429
        %v431 = vrot.slane %v430, 2
        %v432 = vadd.f32 %v430, %v431
        %v433 = vrot.slane %v432, 1
        %v434 = vadd.f32 %v432, %v433
        %v435 = vld [vmem:[#allocation2] sm:$0x1]
        %v437 = vlaneseq
        %v438 = vshrl.u32 %v437, 7
        %v439 = vsub.s32 0, %v438
        %v440 = vrot.slane %v435, %v439
        %441 = vset.pattern.permute.xlu0 0
        %442 = vperm.xlu0 %441, %v440
        %v443 = vpop.permute.xlu0 %442
        %v445 = vadd.f32 %v413, %v443
        %v446 = vadd.f32 %v420, %v443
        %v447 = vadd.f32 %v427, %v443
        %v448 = vadd.f32 %v434, %v443
        %vm453 = vcmask 1041409
        %v454 = vsel %vm453, %v447, %v445
        %v455 = vsel %vm453, %v448, %v446
        %vm458 = vcmask 1041408
        %v459 = vsel %vm458, %v454, -inf
        %v460 = vsel %vm458, %v455, -inf
        %v461 = vmax.f32 %v459, %v460
        %462 = vmax.xlane.f32.xlu0 %v461
        %v463 = vpop.xlane.xlu0 %462
        %v465 = vrot.slane %v463, 1
        %v468 = vsub.f32 %v445, %v463
        %v469 = vsub.f32 %v446, %v463
        %v470 = vsub.f32 %v447, %v465
        %v471 = vsub.f32 %v448, %v465
        %v472 = vmul.f32 %v468, 1.442695
        %v473 = vpow.pop %v472
        %v474 = vmul.f32 %v469, 1.442695
        %v475 = vpow.pop %v474
        %v476 = vmul.f32 %v470, 1.442695
        %v477 = vpow.pop %v476
        %v478 = vmul.f32 %v471, 1.442695
        %v479 = vpow.pop %v478
        %v484 = vrot.slane %v477, 7
        %v485 = vsel %vm453, %v484, %v473
        %v486 = vrot.slane %v479, 7
        %v487 = vsel %vm453, %v486, %v475
        %v490 = vsel %vm458, %v485, 0.0
        %v491 = vsel %vm458, %v487, 0.0
        %v492 = vadd.f32 %v490, %v491
        %493 = vadd.xlane.f32.xlu0 %v492
        %v494 = vpop.xlane.xlu0 %493
        %v496 = vrot.slane %v494, 1
        %v499 = vrcp.pop %v494
        %v500 = vmul.f32 %v473, %v499
        %v501 = vmul.f32 %v475, %v499
        %v502 = vrcp.pop %v496
        %v503 = vmul.f32 %v477, %v502
        %v504 = vmul.f32 %v479, %v502
        %vm505 = vcmask 1040384
        %v506 = vsel %vm505, %v500, 0.00390625
        %v507 = vsel %vm505, %v501, 0.00390625
        %v508 = vsel %vm505, %v503, 0.00390625
        %v509 = vsel %vm505, %v504, 0.00390625
        %v511 = vcombine.high %v383, %v383
        %513 = vmatprep.subr.mxu0 0.0
        %514 = vmatpush1.xpose.msra.mxu0 0.0
        %515 = vmatprep.subr.mxu0 0.0
        %516 = vmatpush1.xpose.msra.mxu0 0.0
        %517 = vmatprep.subr.mxu0 0.0
        %518 = vmatpush1.xpose.msra.mxu0 0.0
        %519 = vmatprep.subr.mxu0 0.0
        %520 = vmatpush1.xpose.msra.mxu0 0.0
        %521 = vmatprep.subr.mxu0 0.0
        %522 = vmatpush1.xpose.msra.mxu0 0.0
        %523 = vmatprep.subr.mxu0 0.0
        %524 = vmatpush1.xpose.msra.mxu0 0.0
        %525 = vmatprep.subr.mxu0 0.0
        %526 = vmatpush1.xpose.msra.mxu0 0.0
        %527 = vmatprep.subr.mxu0 0.0
        %528 = vmatpush1.xpose.msra.mxu0 0.0
        %529 = vmatprep.subr.mxu0 0.0
        %530 = vmatpush1.xpose.msra.mxu0 0.0
        %531 = vmatprep.subr.mxu0 0.0
        %532 = vmatpush1.xpose.msra.mxu0 0.0
        %533 = vmatprep.subr.mxu0 0.0
        %534 = vmatpush1.xpose.msra.mxu0 0.0
        %535 = vmatprep.subr.mxu0 0.0
        %536 = vmatpush1.xpose.msra.mxu0 0.0
        %537 = vmatprep.subr.mxu0 0.0
        %538 = vmatpush1.xpose.msra.mxu0 0.0
        %539 = vmatprep.subr.mxu0 0.0
        %540 = vmatpush1.xpose.msra.mxu0 0.0
        %541 = vmatprep.subr.mxu0 0.0
        %542 = vmatpush1.xpose.msra.mxu0 0.0
        %543 = vmatprep.subr.mxu0 %v507
        %544 = vmatpush1.xpose.msra.mxu0 %v506
        %545 = vmatprep.subr.mxu0 0.0
        %546 = vmatpush2.xpose.msra.mxu0 0.0
        %547 = vmatprep.subr.mxu0 0.0
        %548 = vmatpush2.xpose.msra.mxu0 0.0
        %549 = vmatprep.subr.mxu0 0.0
        %550 = vmatpush2.xpose.msra.mxu0 0.0
        %551 = vmatprep.subr.mxu0 0.0
        %552 = vmatpush2.xpose.msra.mxu0 0.0
        %553 = vmatprep.subr.mxu0 0.0
        %554 = vmatpush2.xpose.msra.mxu0 0.0
        %555 = vmatprep.subr.mxu0 0.0
        %556 = vmatpush2.xpose.msra.mxu0 0.0
        %557 = vmatprep.subr.mxu0 0.0
        %558 = vmatpush2.xpose.msra.mxu0 0.0
        %559 = vmatprep.subr.mxu0 0.0
        %560 = vmatpush2.xpose.msra.mxu0 0.0
        %561 = vmatprep.subr.mxu0 0.0
        %562 = vmatpush2.xpose.msra.mxu0 0.0
        %563 = vmatprep.subr.mxu0 0.0
        %564 = vmatpush2.xpose.msra.mxu0 0.0
        %565 = vmatprep.subr.mxu0 0.0
        %566 = vmatpush2.xpose.msra.mxu0 0.0
        %567 = vmatprep.subr.mxu0 0.0
        %568 = vmatpush2.xpose.msra.mxu0 0.0
        %569 = vmatprep.subr.mxu0 0.0
        %570 = vmatpush2.xpose.msra.mxu0 0.0
        %571 = vmatprep.subr.mxu0 0.0
        %572 = vmatpush2.xpose.msra.mxu0 0.0
        %573 = vmatprep.subr.mxu0 0.0
        %574 = vmatpush2.xpose.msra.mxu0 0.0
        %575 = vmatprep.subr.mxu0 0.0
        %576 = vmatpush2.xpose.msra.mxu0 0.0
        %577 = vmatprep.mubr.f32.mxu0 %v511
        %578 = vmatmul.mubr.f32.gmra.mxu0 %v383
        %v579 = vpop.f32.mrf.mxu0
        %v580 = vadd.f32 0.0, %v579
        %v581 = vpop.f32.mrf.mxu0
        %582 = vdwg.mxu0
        %v584 = vcombine.high %v384, %v384
        %586 = vmatprep.subr.mxu0 0.0
        %587 = vmatpush1.xpose.msra.mxu0 0.0
        %588 = vmatprep.subr.mxu0 0.0
        %589 = vmatpush1.xpose.msra.mxu0 0.0
        %590 = vmatprep.subr.mxu0 0.0
        %591 = vmatpush1.xpose.msra.mxu0 0.0
        %592 = vmatprep.subr.mxu0 0.0
        %593 = vmatpush1.xpose.msra.mxu0 0.0
        %594 = vmatprep.subr.mxu0 0.0
        %595 = vmatpush1.xpose.msra.mxu0 0.0
        %596 = vmatprep.subr.mxu0 0.0
        %597 = vmatpush1.xpose.msra.mxu0 0.0
        %598 = vmatprep.subr.mxu0 0.0
        %599 = vmatpush1.xpose.msra.mxu0 0.0
        %600 = vmatprep.subr.mxu0 0.0
        %601 = vmatpush1.xpose.msra.mxu0 0.0
        %602 = vmatprep.subr.mxu0 0.0
        %603 = vmatpush1.xpose.msra.mxu0 0.0
        %604 = vmatprep.subr.mxu0 0.0
        %605 = vmatpush1.xpose.msra.mxu0 0.0
        %606 = vmatprep.subr.mxu0 0.0
        %607 = vmatpush1.xpose.msra.mxu0 0.0
        %608 = vmatprep.subr.mxu0 0.0
        %609 = vmatpush1.xpose.msra.mxu0 0.0
        %610 = vmatprep.subr.mxu0 0.0
        %611 = vmatpush1.xpose.msra.mxu0 0.0
        %612 = vmatprep.subr.mxu0 0.0
        %613 = vmatpush1.xpose.msra.mxu0 0.0
        %614 = vmatprep.subr.mxu0 0.0
        %615 = vmatpush1.xpose.msra.mxu0 0.0
        %616 = vmatprep.subr.mxu0 %v509
        %617 = vmatpush1.xpose.msra.mxu0 %v508
        %618 = vmatprep.subr.mxu0 0.0
        %619 = vmatpush2.xpose.msra.mxu0 0.0
        %620 = vmatprep.subr.mxu0 0.0
        %621 = vmatpush2.xpose.msra.mxu0 0.0
        %622 = vmatprep.subr.mxu0 0.0
        %623 = vmatpush2.xpose.msra.mxu0 0.0
        %624 = vmatprep.subr.mxu0 0.0
        %625 = vmatpush2.xpose.msra.mxu0 0.0
        %626 = vmatprep.subr.mxu0 0.0
        %627 = vmatpush2.xpose.msra.mxu0 0.0
        %628 = vmatprep.subr.mxu0 0.0
        %629 = vmatpush2.xpose.msra.mxu0 0.0
        %630 = vmatprep.subr.mxu0 0.0
        %631 = vmatpush2.xpose.msra.mxu0 0.0
        %632 = vmatprep.subr.mxu0 0.0
        %633 = vmatpush2.xpose.msra.mxu0 0.0
        %634 = vmatprep.subr.mxu0 0.0
        %635 = vmatpush2.xpose.msra.mxu0 0.0
        %636 = vmatprep.subr.mxu0 0.0
        %637 = vmatpush2.xpose.msra.mxu0 0.0
        %638 = vmatprep.subr.mxu0 0.0
        %639 = vmatpush2.xpose.msra.mxu0 0.0
        %640 = vmatprep.subr.mxu0 0.0
        %641 = vmatpush2.xpose.msra.mxu0 0.0
        %642 = vmatprep.subr.mxu0 0.0
        %643 = vmatpush2.xpose.msra.mxu0 0.0
        %644 = vmatprep.subr.mxu0 0.0
        %645 = vmatpush2.xpose.msra.mxu0 0.0
        %646 = vmatprep.subr.mxu0 0.0
        %647 = vmatpush2.xpose.msra.mxu0 0.0
        %648 = vmatprep.subr.mxu0 0.0
        %649 = vmatpush2.xpose.msra.mxu0 0.0
        %650 = vmatprep.mubr.f32.mxu0 %v584
        %651 = vmatmul.mubr.f32.gmra.mxu0 %v384
        %v652 = vpop.f32.mrf.mxu0
        %v653 = vadd.f32 0.0, %v652
        %v654 = vpop.f32.mrf.mxu0
        %655 = vdwg.mxu0
        %v656 = vld [vmem:[%s3] sm:$0xf]
        %v657 = vld [vmem:[%s4] sm:$0xf]
        %660 = vset.pattern.permute.xlu0 1
        %661 = vperm.xlu0 %660, %v580
        %v662 = vpop.permute.xlu0 %661
        %663 = vset.pattern.permute.xlu0 1
        %664 = vperm.xlu0 %663, %v653
        %v665 = vpop.permute.xlu0 %664
        %v666 = vlaneseq
        %v667 = vand.u32 %v666, 127
        %v668 = vlaneseq
        %v669 = vshrl.u32 %v668, 7
        %v670 = vsub.s32 %v667, %v669
        %v671 = vrot.slane %v662, %v670
        %v672 = vlaneseq
        %v673 = vshrl.u32 %v672, 7
        %v674 = vsub.s32 %v667, %v673
        %v675 = vrot.slane %v665, %v674
        %v676 = vsel %vm453, %v675, %v671
        %vm677 = vcmask 31744
        %v678 = vsel %vm677, %v676, 0
        %v681 = vsel %vm406, %v657, 0
        %683 = vmatprep.subr.mxu0 0.0
        %684 = vmatpush1.msra.mxu0 0.0
        %685 = vmatprep.subr.mxu0 0.0
        %686 = vmatpush1.msra.mxu0 0.0
        %687 = vmatprep.subr.mxu0 0.0
        %688 = vmatpush1.msra.mxu0 0.0
        %689 = vmatprep.subr.mxu0 0.0
        %690 = vmatpush1.msra.mxu0 0.0
        %691 = vmatprep.subr.mxu0 0.0
        %692 = vmatpush1.msra.mxu0 0.0
        %693 = vmatprep.subr.mxu0 0.0
        %694 = vmatpush1.msra.mxu0 0.0
        %695 = vmatprep.subr.mxu0 0.0
        %696 = vmatpush1.msra.mxu0 0.0
        %697 = vmatprep.subr.mxu0 0.0
        %698 = vmatpush1.msra.mxu0 0.0
        %699 = vmatprep.subr.mxu0 0.0
        %700 = vmatpush1.msra.mxu0 0.0
        %701 = vmatprep.subr.mxu0 0.0
        %702 = vmatpush1.msra.mxu0 0.0
        %703 = vmatprep.subr.mxu0 0.0
        %704 = vmatpush1.msra.mxu0 0.0
        %705 = vmatprep.subr.mxu0 0.0
        %706 = vmatpush1.msra.mxu0 0.0
        %707 = vmatprep.subr.mxu0 0.0
        %708 = vmatpush1.msra.mxu0 0.0
        %709 = vmatprep.subr.mxu0 0.0
        %710 = vmatpush1.msra.mxu0 0.0
        %711 = vmatprep.subr.mxu0 0.0
        %712 = vmatpush1.msra.mxu0 0.0
        %713 = vmatprep.subr.mxu0 0.0
        %714 = vmatpush1.msra.mxu0 %v681
        %715 = vmatprep.subr.mxu0 0.0
        %716 = vmatpush2.msra.mxu0 0.0
        %717 = vmatprep.subr.mxu0 0.0
        %718 = vmatpush2.msra.mxu0 0.0
        %719 = vmatprep.subr.mxu0 0.0
        %720 = vmatpush2.msra.mxu0 0.0
        %721 = vmatprep.subr.mxu0 0.0
        %722 = vmatpush2.msra.mxu0 0.0
        %723 = vmatprep.subr.mxu0 0.0
        %724 = vmatpush2.msra.mxu0 0.0
        %725 = vmatprep.subr.mxu0 0.0
        %726 = vmatpush2.msra.mxu0 0.0
        %727 = vmatprep.subr.mxu0 0.0
        %728 = vmatpush2.msra.mxu0 0.0
        %729 = vmatprep.subr.mxu0 0.0
        %730 = vmatpush2.msra.mxu0 0.0
        %731 = vmatprep.subr.mxu0 0.0
        %732 = vmatpush2.msra.mxu0 0.0
        %733 = vmatprep.subr.mxu0 0.0
        %734 = vmatpush2.msra.mxu0 0.0
        %735 = vmatprep.subr.mxu0 0.0
        %736 = vmatpush2.msra.mxu0 0.0
        %737 = vmatprep.subr.mxu0 0.0
        %738 = vmatpush2.msra.mxu0 0.0
        %739 = vmatprep.subr.mxu0 0.0
        %740 = vmatpush2.msra.mxu0 0.0
        %741 = vmatprep.subr.mxu0 0.0
        %742 = vmatpush2.msra.mxu0 0.0
        %743 = vmatprep.subr.mxu0 0.0
        %744 = vmatpush2.msra.mxu0 0.0
        %745 = vmatprep.subr.mxu0 0.0
        %746 = vmatpush2.msra.mxu0 0.0
        %747 = vmatprep.mubr.f32.mxu0 0.0
        %748 = vmatmul.mubr.f32.gmra.mxu0 %v678
        %v749 = vpop.f32.mrf.mxu0
        %v750 = vadd.f32 0.0, %v749
        %v751 = vpop.f32.mrf.mxu0
        %752 = vdwg.mxu0
        %753 = vset.pattern.permute.xlu0 0
        %754 = vperm.xlu0 %753, %v580
        %v755 = vpop.permute.xlu0 %754
        %756 = vset.pattern.permute.xlu0 0
        %757 = vperm.xlu0 %756, %v653
        %v758 = vpop.permute.xlu0 %757
        %v759 = vlaneseq
        %v760 = vshrl.u32 %v759, 7
        %v761 = vsub.s32 %v667, %v760
        %v762 = vrot.slane %v755, %v761
        %v763 = vlaneseq
        %v764 = vshrl.u32 %v763, 7
        %v765 = vsub.s32 %v667, %v764
        %v766 = vrot.slane %v758, %v765
        %v767 = vsel %vm453, %v766, %v762
        %v768 = vsel %vm677, %v767, 0
        %v771 = vsel %vm406, %v656, 0
        %773 = vmatprep.subr.mxu0 0.0
        %774 = vmatpush1.msra.mxu0 0.0
        %775 = vmatprep.subr.mxu0 0.0
        %776 = vmatpush1.msra.mxu0 0.0
        %777 = vmatprep.subr.mxu0 0.0
        %778 = vmatpush1.msra.mxu0 0.0
        %779 = vmatprep.subr.mxu0 0.0
        %780 = vmatpush1.msra.mxu0 0.0
        %781 = vmatprep.subr.mxu0 0.0
        %782 = vmatpush1.msra.mxu0 0.0
        %783 = vmatprep.subr.mxu0 0.0
        %784 = vmatpush1.msra.mxu0 0.0
        %785 = vmatprep.subr.mxu0 0.0
        %786 = vmatpush1.msra.mxu0 0.0
        %787 = vmatprep.subr.mxu0 0.0
        %788 = vmatpush1.msra.mxu0 0.0
        %789 = vmatprep.subr.mxu0 0.0
        %790 = vmatpush1.msra.mxu0 0.0
        %791 = vmatprep.subr.mxu0 0.0
        %792 = vmatpush1.msra.mxu0 0.0
        %793 = vmatprep.subr.mxu0 0.0
        %794 = vmatpush1.msra.mxu0 0.0
        %795 = vmatprep.subr.mxu0 0.0
        %796 = vmatpush1.msra.mxu0 0.0
        %797 = vmatprep.subr.mxu0 0.0
        %798 = vmatpush1.msra.mxu0 0.0
        %799 = vmatprep.subr.mxu0 0.0
        %800 = vmatpush1.msra.mxu0 0.0
        %801 = vmatprep.subr.mxu0 0.0
        %802 = vmatpush1.msra.mxu0 0.0
        %803 = vmatprep.subr.mxu0 0.0
        %804 = vmatpush1.msra.mxu0 %v771
        %805 = vmatprep.subr.mxu0 0.0
        %806 = vmatpush2.msra.mxu0 0.0
        %807 = vmatprep.subr.mxu0 0.0
        %808 = vmatpush2.msra.mxu0 0.0
        %809 = vmatprep.subr.mxu0 0.0
        %810 = vmatpush2.msra.mxu0 0.0
        %811 = vmatprep.subr.mxu0 0.0
        %812 = vmatpush2.msra.mxu0 0.0
        %813 = vmatprep.subr.mxu0 0.0
        %814 = vmatpush2.msra.mxu0 0.0
        %815 = vmatprep.subr.mxu0 0.0
        %816 = vmatpush2.msra.mxu0 0.0
        %817 = vmatprep.subr.mxu0 0.0
        %818 = vmatpush2.msra.mxu0 0.0
        %819 = vmatprep.subr.mxu0 0.0
        %820 = vmatpush2.msra.mxu0 0.0
        %821 = vmatprep.subr.mxu0 0.0
        %822 = vmatpush2.msra.mxu0 0.0
        %823 = vmatprep.subr.mxu0 0.0
        %824 = vmatpush2.msra.mxu0 0.0
        %825 = vmatprep.subr.mxu0 0.0
        %826 = vmatpush2.msra.mxu0 0.0
        %827 = vmatprep.subr.mxu0 0.0
        %828 = vmatpush2.msra.mxu0 0.0
        %829 = vmatprep.subr.mxu0 0.0
        %830 = vmatpush2.msra.mxu0 0.0
        %831 = vmatprep.subr.mxu0 0.0
        %832 = vmatpush2.msra.mxu0 0.0
        %833 = vmatprep.subr.mxu0 0.0
        %834 = vmatpush2.msra.mxu0 0.0
        %835 = vmatprep.subr.mxu0 0.0
        %836 = vmatpush2.msra.mxu0 0.0
        %837 = vmatprep.mubr.f32.mxu0 0.0
        %838 = vmatmul.mubr.f32.gmra.mxu0 %v768
        %v839 = vpop.f32.mrf.mxu0
        %v840 = vadd.f32 %v750, %v839
        %v841 = vpop.f32.mrf.mxu0
        %842 = vdwg.mxu0
        %v843 = vld [vmem:[%s5] sm:$0x1]
        %v845 = vlaneseq
        %v846 = vshrl.u32 %v845, 7
        %v847 = vsub.s32 0, %v846
        %v848 = vrot.slane %v843, %v847
        %v850 = vadd.f32 %v840, %v848
        %vm851 = vcmask 58368
        %v852 = vsel %vm851, %v850, 0.0
        %853 = vadd.xlane.f32.xlu0 %v852
        %v854 = vpop.xlane.xlu0 %853
        %v855 = vrcp.pop 8.0
        %v856 = vmul.f32 %v854, %v855
        %v857 = vsub.f32 %v850, %v856
        %v858 = vmul.f32 %v857, %v857
        %v859 = vsel %vm851, %v858, 0.0
        %860 = vadd.xlane.f32.xlu0 %v859
        %v861 = vpop.xlane.xlu0 %860
        %v862 = vmul.f32 %v861, %v855
        %v863 = vadd.f32 %v862, 1e-05
        %v864 = vrsqrt.pop %v863
        %v865 = vmul.f32 %v857, %v864
        %v866 = vld [vmem:[%s6] sm:$0x1]
        %v868 = vlaneseq
        %v869 = vshrl.u32 %v868, 7
        %v870 = vsub.s32 0, %v869
        %v871 = vrot.slane %v866, %v870
        %v873 = vmul.f32 %v865, %v871
        %v874 = vld [vmem:[%s7] sm:$0x1]
        %v876 = vlaneseq
        %v877 = vshrl.u32 %v876, 7
        %v878 = vsub.s32 0, %v877
        %v879 = vrot.slane %v874, %v878
        %v881 = vadd.f32 %v873, %v879
        %v882 = vmax.f32 %v881, 0.0
        %v883 = vld [vmem:[%s8] sm:$0xff]
        %v884 = vld [vmem:[%s9] sm:$0x1]
        %v886 = vlaneseq
        %v887 = vshrl.u32 %v886, 7
        %v888 = vsub.s32 0, %v887
        %v889 = vrot.slane %v884, %v888
        %vm891 = vcmask 64512
        %v893 = vsel %vm891, %v882, 0
        %895 = vmatprep.subr.mxu0 0.0
        %896 = vmatpush1.msra.mxu0 0.0
        %897 = vmatprep.subr.mxu0 0.0
        %898 = vmatpush1.msra.mxu0 0.0
        %899 = vmatprep.subr.mxu0 0.0
        %900 = vmatpush1.msra.mxu0 0.0
        %901 = vmatprep.subr.mxu0 0.0
        %902 = vmatpush1.msra.mxu0 0.0
        %903 = vmatprep.subr.mxu0 0.0
        %904 = vmatpush1.msra.mxu0 0.0
        %905 = vmatprep.subr.mxu0 0.0
        %906 = vmatpush1.msra.mxu0 0.0
        %907 = vmatprep.subr.mxu0 0.0
        %908 = vmatpush1.msra.mxu0 0.0
        %909 = vmatprep.subr.mxu0 0.0
        %910 = vmatpush1.msra.mxu0 0.0
        %911 = vmatprep.subr.mxu0 0.0
        %912 = vmatpush1.msra.mxu0 0.0
        %913 = vmatprep.subr.mxu0 0.0
        %914 = vmatpush1.msra.mxu0 0.0
        %915 = vmatprep.subr.mxu0 0.0
        %916 = vmatpush1.msra.mxu0 0.0
        %917 = vmatprep.subr.mxu0 0.0
        %918 = vmatpush1.msra.mxu0 0.0
        %919 = vmatprep.subr.mxu0 0.0
        %920 = vmatpush1.msra.mxu0 0.0
        %921 = vmatprep.subr.mxu0 0.0
        %922 = vmatpush1.msra.mxu0 0.0
        %923 = vmatprep.subr.mxu0 0.0
        %924 = vmatpush1.msra.mxu0 0.0
        %925 = vmatprep.subr.mxu0 0.0
        %926 = vmatpush1.msra.mxu0 %v883
        %927 = vmatprep.subr.mxu0 0.0
        %928 = vmatpush2.msra.mxu0 0.0
        %929 = vmatprep.subr.mxu0 0.0
        %930 = vmatpush2.msra.mxu0 0.0
        %931 = vmatprep.subr.mxu0 0.0
        %932 = vmatpush2.msra.mxu0 0.0
        %933 = vmatprep.subr.mxu0 0.0
        %934 = vmatpush2.msra.mxu0 0.0
        %935 = vmatprep.subr.mxu0 0.0
        %936 = vmatpush2.msra.mxu0 0.0
        %937 = vmatprep.subr.mxu0 0.0
        %938 = vmatpush2.msra.mxu0 0.0
        %939 = vmatprep.subr.mxu0 0.0
        %940 = vmatpush2.msra.mxu0 0.0
        %941 = vmatprep.subr.mxu0 0.0
        %942 = vmatpush2.msra.mxu0 0.0
        %943 = vmatprep.subr.mxu0 0.0
        %944 = vmatpush2.msra.mxu0 0.0
        %945 = vmatprep.subr.mxu0 0.0
        %946 = vmatpush2.msra.mxu0 0.0
        %947 = vmatprep.subr.mxu0 0.0
        %948 = vmatpush2.msra.mxu0 0.0
        %949 = vmatprep.subr.mxu0 0.0
        %950 = vmatpush2.msra.mxu0 0.0
        %951 = vmatprep.subr.mxu0 0.0
        %952 = vmatpush2.msra.mxu0 0.0
        %953 = vmatprep.subr.mxu0 0.0
        %954 = vmatpush2.msra.mxu0 0.0
        %955 = vmatprep.subr.mxu0 0.0
        %956 = vmatpush2.msra.mxu0 0.0
        %957 = vmatprep.subr.mxu0 0.0
        %958 = vmatpush2.msra.mxu0 0.0
        %959 = vmatprep.mubr.f32.mxu0 0.0
        %960 = vmatmul.mubr.f32.gmra.mxu0 %v893
        %v961 = vpop.f32.mrf.mxu0
        %v962 = vadd.f32 %v889, %v961
        %v963 = vpop.f32.mrf.mxu0
        %964 = vdwg.mxu0
        %v965 = vxor.u32 %v962, 2147483648
        %v966 = vmul.f32 %v965, 1.442695
        %v967 = vpow.pop %v966
        %v968 = vadd.f32 %v967, 1.0
        %v969 = vrcp.pop %v968
        %v970 = vmul.f32 1.0, %v969
        %v971 = vlaneseq
        %v972 = vshrl.u32 %v971, 7
        %v973 = vsub.s32 0, %v972
        %v974 = vrot.slane %v970, %v973
        %976 = vbcast.lane.b32.xlu0 %v974, 256
        %v977 = vpop.permute.xlu0 %976
        %v978 = vlaneseq
        %v979 = vshrl.u32 %v978, 7
        %v980 = vsub.s32 1, %v979
        %v981 = vrot.slane %v970, %v980
        %983 = vbcast.lane.b32.xlu0 %v981, 256
        %v984 = vpop.permute.xlu0 %983
        %v988 = vunpack.c.l.s4 839922192
        %v989 = vunpack.c.0.s8 %v988
        %v990 = vlaneseq
        %v991 = vshrl.u32 %v990, 7
        %v992 = vsub.s32 %v989, %v991
        %v993 = vrot.slane %v977, %v992
        %v995 = vunpack.c.l.s4 839922192
        %v996 = vunpack.c.0.s8 %v995
        %v997 = vlaneseq
        %v998 = vshrl.u32 %v997, 7
        %v999 = vsub.s32 %v996, %v998
        %v1000 = vrot.slane %v984, %v999
        %v1003 = vmul.f32 %v383, %v993
        %v1004 = vmul.f32 %v384, %v1000
        %1005 = vst [vmem:[%s380] sm:$0xff] %v1003
        %1006 = vst [vmem:[%s380 + $0x8] sm:$0xff] %v1004
        %s1007 = sand.u32 %s252, 1
        %s1008 = scalar_lea.sflag [#allocation5], %s1007
        %s1009 = sand.u32 %s252, 1
        %s1010 = smul.addr %s1009, 16
        %s1011 = scalar_lea.vmem [#allocation6], %s1010
        // Predicated region
        $region65: #{tpu_custom_call.1} parent=59 // pred_check
          %p1012 = pneg %p262
        $region66: #{tpu_custom_call.1} parent=59 // pred_check_branch
          %1014 = sbr.rel (%p1012) target = $region68
        $region67: #{tpu_custom_call.1} parent=59 // pred_region
          %s1015 = smul.u32 2, %s29
          %s1017 = ssub.s32 256, 256
          %1018 = vsyncadd %s1008, %s1017
          %s1019 = smul.addr %s1015, 2
          %s1020 = smul.addr %s1019, 64
          %s1021 = scalar_lea.hbm %s10, %s1020
          %s1022 = sshll.u32 %s1011, 4
          %s1023 = int_to_ptr.vmem [resolvable:$true] %s1022
          %1028 = dma.vmem_to_hbm [thread:$0]  %s1023, 256, %s1021, %s1008, 128, 128, 8
        $region68: #{tpu_custom_call.1} parent=59 // pred_fallthru
          _
      $region60: #{tpu_custom_call.1} parent=5 // pred_fallthru
        _
      %p1029 = scmp.le.s32.totalorder 2, %s24
      // Predicated region
      $region69: #{tpu_custom_call.1} parent=5 // pred_check
        %p1030 = pneg %p1029
      $region70: #{tpu_custom_call.1} parent=5 // pred_check_branch
        %1032 = sbr.rel (%p1030) target = $region72
      $region71: #{tpu_custom_call.1} parent=5 // pred_region
        %s1033 = ssub.s32 %s24, 2
        // Predicated region
        $region73: #{tpu_custom_call.1} parent=71 // pred_check
          %p1034 = pneg %p268
        $region74: #{tpu_custom_call.1} parent=71 // pred_check_branch
          %1036 = sbr.rel (%p1034) target = $region76
        $region75: #{tpu_custom_call.1} parent=71 // pred_region
          %s1037 = sand.u32 %s253, 1
          %s1038 = scalar_lea.sflag [#allocation5], %s1037
          %s1039 = sand.u32 %s253, 1
          %s1040 = smul.addr %s1039, 16
          %s1041 = scalar_lea.vmem [#allocation6], %s1040
          %1042 = dma.done %s1038, 256
        $region76: #{tpu_custom_call.1} parent=71 // pred_fallthru
          _
      $region72: #{tpu_custom_call.1} parent=5 // pred_fallthru
        _
    $region6: #{tpu_custom_call.1} parent=1 // loop_footer
      %s28 = sadd.s32 1, %s24
    $region7: #{tpu_custom_call.1} parent=1 // loop_footer_branch
      %23 = sbr.rel target = $region3
    $region8: #{tpu_custom_call.1} parent=1 // loop_exit
      _
    %1043 = vsyncpa [#allocation4], 1
    %s1044 = scalar_lea.sflag [#allocation4], 1
    %1045 = vsyncpa %s1044, 1
    %1046 = vsyncpa [#allocation5], 1
    %s1047 = scalar_lea.sflag [#allocation5], 1
    %1048 = vsyncpa %s1047, 1

</llo_original>
